<compile_context>
chip_gen: v6e
topology: v6e:2x2x1
jax: 0.10.0
libtpu: 0.0.40
codegen_flags: <defaults>
</compile_context>

<pallas_src>
import functools

import jax
import jax.numpy as jnp
from jax import lax
from jax.experimental import pallas as pl
from jax.experimental.pallas import tpu as pltpu


def _round_up(x, m):
    return (x + m - 1) // m * m


def _pick_tile(n, max_tile=256):
    """Largest row tile <= max_tile that divides n (multiple of 8), else full n."""
    if n <= max_tile:
        return n
    for t in (256, 128, 64, 32, 16, 8):
        if t <= max_tile and n % t == 0:
            return t
    return n


def _vmem_limit_bytes():
    # Per-generation scoped-VMEM budget: v7x has only 64 MiB per TensorCore, so a
    # fixed 128 MiB limit is not honorable there.  Use ~3/4 of physical capacity.
    try:
        cap = pltpu.get_tpu_info().vmem_capacity_bytes
    except Exception:  # pragma: no cover - conservative fallback
        cap = 64 * 1024 * 1024
    return int(cap * 3 // 4)


# --------------------------------------------------------------------------- #
# Kernel 1: convolution as im2col matmul (MXU).
# --------------------------------------------------------------------------- #
def _conv_matmul_kernel(cols_ref, w_ref, b_ref, y_ref):
    # cols_ref: [1, TN, KKCp]   w_ref: [KKCp, Cp]   b_ref: [1, Cp]   y_ref: [1, TN, Cp]
    y = jnp.dot(cols_ref[0], w_ref[...], preferred_element_type=jnp.float32)
    y_ref[0] = (y + b_ref[...]).astype(y_ref.dtype)


# --------------------------------------------------------------------------- #
# Kernel 2: 7-NN adjacency from Gram-trick pairwise distances, row-tiled.
# --------------------------------------------------------------------------- #
def _knn_adj_kernel(yrow_ref, yt_ref, adj_ref, *, num_neighbors):
    # yrow_ref: [1, TI, Cp]  (row tile of y)
    # yt_ref:   [1, Cp, N]   (all of y, transposed; block constant over the tile axis)
    # adj_ref:  [1, TI, N]
    ti = yrow_ref.shape[1]
    n = yt_ref.shape[2]
    i = pl.program_id(1)

    rows = yrow_ref[0]                                   # [TI, Cp]
    yt = yt_ref[0]                                       # [Cp, N]

    # Pairwise squared Euclidean distances via the Gram trick (one MXU matmul).
    g = jnp.dot(rows, yt, preferred_element_type=jnp.float32)        # [TI, N]
    rn = jnp.sum(rows * rows, axis=-1, keepdims=True)                # [TI, 1]
    cn = jnp.sum(yt * yt, axis=0, keepdims=True)                     # [1, N]
    d2 = jnp.maximum(rn + cn - 2.0 * g, jnp.float32(0.0))

    # Force an exact zero on the diagonal (self distance), as cdist would give.
    row_g = lax.broadcasted_iota(jnp.int32, (ti, n), 0) + i * ti
    col_g = lax.broadcasted_iota(jnp.int32, (ti, n), 1)
    d2 = jnp.where(row_g == col_g, jnp.float32(0.0), d2)

    # Select the `num_neighbors` smallest entries per row with stable tie-break by
    # column index -> exactly reproduces np.argsort(1).argsort(1) <= num_neighbors-1.
    # O(num_neighbors * TI * N) VPU/XLU work; no [N,N,N] temporaries.
    col_f = col_g.astype(jnp.float32)
    big_col = jnp.float32(n)
    inf = jnp.float32(jnp.inf)
    selected = jnp.zeros((ti, n), dtype=jnp.bool_)
    for _ in range(num_neighbors):
        masked = jnp.where(selected, inf, d2)                        # [TI, N]
        v = jnp.min(masked, axis=-1, keepdims=True)                  # [TI, 1]
        cand = masked == v
        jmin = jnp.min(jnp.where(cand, col_f, big_col), axis=-1, keepdims=True)
        selected = selected | (col_f == jmin)

    adj_ref[0] = selected.astype(adj_ref.dtype)


# --------------------------------------------------------------------------- #
# Wrapper
# --------------------------------------------------------------------------- #
def pre_process_layer_graph(x_nchw, weight, bias, *, stride=1,
                            num_neighbors=7, adj_dtype=jnp.float32):
    """x_nchw: [B,Cin,H,W]; weight: [Cout,Cin,K,K]; bias: [Cout].
    Returns y [B,N,Cout] and adj [B,N,N] (0/1)."""
    B, Cin, H, W = x_nchw.shape
    Cout, _, K, _ = weight.shape
    pad = K // 2

    # --- glue: im2col patches, inner order (kh, kw, cin) ---
    # TODO(synk): replace im2col with K*K shifted in-kernel matmuls if the conv
    # input ever dominates HBM traffic (adj writeback dominates for realistic N).
    x = jnp.transpose(x_nchw, (0, 2, 3, 1)).astype(jnp.float32)       # NHWC
    xp = jnp.pad(x, ((0, 0), (pad, pad), (pad, pad), (0, 0)))
    Ho = (H + 2 * pad - K) // stride + 1
    Wo = (W + 2 * pad - K) // stride + 1
    N = Ho * Wo
    assert N >= num_neighbors, "need at least num_neighbors graph nodes"
    patches = [xp[:, kh:kh + stride * Ho:stride, kw:kw + stride * Wo:stride, :]
               for kh in range(K) for kw in range(K)]
    cols = jnp.stack(patches, axis=3).reshape(B, N, K * K * Cin)

    # MXU / lane-friendly zero padding of contraction and output-channel dims.
    KKC = K * K * Cin
    KKCp = _round_up(KKC, 128)
    Cp = _round_up(Cout, 128)
    cols = jnp.pad(cols, ((0, 0), (0, 0), (0, KKCp - KKC)))
    w2d = jnp.transpose(weight, (2, 3, 1, 0)).reshape(KKC, Cout).astype(jnp.float32)
    w2d = jnp.pad(w2d, ((0, KKCp - KKC), (0, Cp - Cout)))
    b2d = jnp.pad(bias.reshape(1, Cout).astype(jnp.float32), ((0, 0), (0, Cp - Cout)))

    vmem_limit = _vmem_limit_bytes()
    tn = _pick_tile(N)

    # --- kernel 1: convolution ---
    yp = pl.pallas_call(
        _conv_matmul_kernel,
        out_shape=jax.ShapeDtypeStruct((B, N, Cp), jnp.float32),
        grid_spec=pltpu.PrefetchScalarGridSpec(
            num_scalar_prefetch=0,
            grid=(B, N // tn),
            in_specs=[
                pl.BlockSpec((1, tn, KKCp), lambda b, n: (b, n, 0)),
                pl.BlockSpec((KKCp, Cp), lambda b, n: (0, 0)),
                pl.BlockSpec((1, Cp), lambda b, n: (0, 0)),
            ],
            out_specs=pl.BlockSpec((1, tn, Cp), lambda b, n: (b, n, 0)),
        ),
        compiler_params=pltpu.CompilerParams(
            dimension_semantics=("parallel", "parallel"),
            vmem_limit_bytes=vmem_limit),
    )(cols, w2d, b2d)

    # --- kernel 2: 7-NN adjacency, row-tiled over N ---
    ypT = jnp.transpose(yp, (0, 2, 1))                                # [B, Cp, N] glue
    ti = _pick_tile(N)
    adj = pl.pallas_call(
        functools.partial(_knn_adj_kernel, num_neighbors=num_neighbors),
        out_shape=jax.ShapeDtypeStruct((B, N, N), adj_dtype),
        grid_spec=pltpu.PrefetchScalarGridSpec(
            num_scalar_prefetch=0,
            grid=(B, N // ti),
            in_specs=[
                pl.BlockSpec((1, ti, Cp), lambda b, i: (b, i, 0)),
                pl.BlockSpec((1, Cp, N), lambda b, i: (b, 0, 0)),
            ],
            out_specs=pl.BlockSpec((1, ti, N), lambda b, i: (b, i, 0)),
        ),
        compiler_params=pltpu.CompilerParams(
            dimension_semantics=("parallel", "parallel"),
            vmem_limit_bytes=vmem_limit),
    )(yp, ypT)

    y = yp[..., :Cout]
    return y, adj


if __name__ == "__main__":
    key = jax.random.PRNGKey(0)
    kx, kw, kb = jax.random.split(key, 3)
    # GCN_Unit's head (Pre_ProcessLayer_Graph) uses kernel_size=3, stride=2.
    B, Cin, H, W = 2, 4, 16, 16
    Cout, K, stride = 8, 3, 2

    x = jax.random.normal(kx, (B, Cin, H, W), jnp.float32)
    weight = 0.1 * jax.random.normal(kw, (Cout, Cin, K, K), jnp.float32)
    bias = 0.1 * jax.random.normal(kb, (Cout,), jnp.float32)

    y, adj = pre_process_layer_graph(x, weight, bias, stride=stride)
    jax.block_until_ready((y, adj))

    # Reference conv (XLA), then the same reshape/permute as the PyTorch module.
    yref = lax.conv_general_dilated(
        x, weight, window_strides=(stride, stride),
        padding=((K // 2, K // 2), (K // 2, K // 2)),
        dimension_numbers=("NCHW", "OIHW", "NCHW"))
    yref = yref + bias[None, :, None, None]
    Bo, Co, Ho, Wo = yref.shape
    N = Ho * Wo
    yref = jnp.transpose(yref.reshape(Bo, Co, N), (0, 2, 1))

    assert y.shape == (B, N, Cout) and adj.shape == (B, N, N)
    assert jnp.allclose(y, yref, atol=1e-4, rtol=1e-4)
    # adjacency is 0/1, exactly 7 neighbours per row (rank <= 6), self always included
    assert bool(jnp.all((adj == 0.0) | (adj == 1.0)))
    assert bool(jnp.all(jnp.sum(adj, axis=-1) == 7.0))
    assert bool(jnp.all(jnp.diagonal(adj, axis1=1, axis2=2) == 1.0))

    print("KERNEL_OK")
</pallas_src>

<mosaic_0001>
module attributes {stable_mosaic.version = 11 : i64} {
  func.func @_conv_matmul_kernel(%arg0: i32, %arg1: i32, %arg2: memref<1x64x128xf32, #tpu.memory_space<vmem>>, %arg3: memref<128x128xf32, #tpu.memory_space<vmem>>, %arg4: memref<1x128xf32, #tpu.memory_space<vmem>>, %arg5: memref<1x64x128xf32, #tpu.memory_space<vmem>>) attributes {dimension_semantics = [#tpu.dimension_semantics<parallel>, #tpu.dimension_semantics<parallel>], iteration_bounds = array<i64: 2, 1>, scalar_prefetch = 0 : i64, scratch_operands = 0 : i64, tpu.core_type = #tpu.core_type<tc>, window_params = [{transform_indices = @transform_0, window_bounds = array<i64: 1, 64, 128>}, {pipeline_mode = #tpu.pipeline_mode<synchronous>, transform_indices = @transform_1, window_bounds = array<i64: 128, 128>}, {pipeline_mode = #tpu.pipeline_mode<synchronous>, transform_indices = @transform_2, window_bounds = array<i64: 1, 128>}, {transform_indices = @transform_3, window_bounds = array<i64: 1, 64, 128>}]} {
    %c0 = arith.constant 0 : index
    %c0_0 = arith.constant 0 : index
    %c0_1 = arith.constant 0 : index
    %0 = vector.load %arg2[%c0, %c0_0, %c0_1] : memref<1x64x128xf32, #tpu.memory_space<vmem>>, vector<1x64x128xf32>
    %1 = vector.shape_cast %0 : vector<1x64x128xf32> to vector<64x128xf32>
    %c0_2 = arith.constant 0 : index
    %c0_3 = arith.constant 0 : index
    %2 = vector.load %arg3[%c0_2, %c0_3] : memref<128x128xf32, #tpu.memory_space<vmem>>, vector<128x128xf32>
    %cst = arith.constant dense<0.000000e+00> : vector<64x128xf32>
    %3 = tpu.matmul %1, %2, %cst {dimension_numbers = #tpu.dot_dimension_numbers<[1], [0], [0], [1], [0, 0, 1, 1], [], []>} : vector<64x128xf32>, vector<128x128xf32>, vector<64x128xf32> -> vector<64x128xf32>
    %c0_4 = arith.constant 0 : index
    %c0_5 = arith.constant 0 : index
    %4 = vector.load %arg4[%c0_4, %c0_5] : memref<1x128xf32, #tpu.memory_space<vmem>>, vector<1x128xf32>
    %5 = vector.broadcast %4 : vector<1x128xf32> to vector<64x128xf32>
    %6 = arith.addf %3, %5 : vector<64x128xf32>
    %c0_6 = arith.constant 0 : index
    %c0_7 = arith.constant 0 : index
    %c0_8 = arith.constant 0 : index
    %7 = vector.load %arg5[%c0_6, %c0_7, %c0_8] : memref<1x64x128xf32, #tpu.memory_space<vmem>>, vector<1x64x128xf32>
    %8 = vector.shape_cast %7 : vector<1x64x128xf32> to vector<64x128xf32>
    %9 = vector.shape_cast %6 : vector<64x128xf32> to vector<1x64x128xf32>
    tpu.vector_store %arg5[%c0_6, %c0_7, %c0_8], %9 {strides = array<i32>} : memref<1x64x128xf32, #tpu.memory_space<vmem>>, vector<1x64x128xf32>,
    return
  }
  func.func @transform_0(%arg0: i32, %arg1: i32) -> (i32, i32, i32) {
    %c0_i32 = arith.constant 0 : i32
    %c0_i32_0 = arith.constant 0 : i32
    return %arg0, %arg1, %c0_i32 : i32, i32, i32
  }
  func.func @transform_1(%arg0: i32, %arg1: i32) -> (i32, i32) {
    %c0_i32 = arith.constant 0 : i32
    %c0_i32_0 = arith.constant 0 : i32
    %c0_i32_1 = arith.constant 0 : i32
    return %c0_i32, %c0_i32_0 : i32, i32
  }
  func.func @transform_2(%arg0: i32, %arg1: i32) -> (i32, i32) {
    %c0_i32 = arith.constant 0 : i32
    %c0_i32_0 = arith.constant 0 : i32
    %c0_i32_1 = arith.constant 0 : i32
    return %c0_i32, %c0_i32_0 : i32, i32
  }
  func.func @transform_3(%arg0: i32, %arg1: i32) -> (i32, i32, i32) {
    %c0_i32 = arith.constant 0 : i32
    %c0_i32_0 = arith.constant 0 : i32
    return %arg0, %arg1, %c0_i32 : i32, i32, i32
  }
}

</mosaic_0001>

<llo_original>
// kernel: tpu_custom_call.1
$region0: #{tpu_custom_call.1}
  #allocation0 [shape = 'u32[]', space=smem, size = 0x4, offset = 0x4, fixed_abs, tag = 'smem constant byte address 0x4 - core index']
  #allocation1 [shape = 'u32[144,128]{1,0:T(1,128)}', space=vmem, size = 0x12000, scoped, tag = 'internal scratch']
  %s0 = inlined_call_operand.hbm [shape: f32[2,64,128], index: 0, kind: input, shape index: {}]
  %s1 = inlined_call_operand.hbm [shape: f32[128,128], index: 1, kind: input, shape index: {}]
  %s2 = inlined_call_operand.vmem [shape: f32[1,128], index: 2, kind: input, shape index: {}]
  %s3 = inlined_call_operand.hbm [shape: f32[2,64,128], index: 3, kind: output, shape index: {}]
  %s4 = sld [smem:[#allocation0]]
  $region53: #{tpu_custom_call.1} parent=0
    _
  %s6 = ssub.s32 1, %s4
  %s7 = scalar_select 0, %s6, %s4
  $region1: #{tpu_custom_call.1} parent=0
    #allocation2 [shape = 'u8[65536]{0}', space=vmem, size = 0x10000, scoped, tag = 'input window, operand 0']
    #allocation3 [shape = 's32[2]{0}', space=sflag, size = 0x8, scoped, tag = 'scoped memory for tpu_custom_call.1']
    #allocation4 [shape = 's32[2]{0}', space=sflag, size = 0x8, scoped, tag = 'scoped memory for tpu_custom_call.1']
    #allocation5 [shape = 'u8[65536]{0}', space=vmem, size = 0x10000, scoped, tag = 'input window, operand 1, single buffered']
    #allocation6 [shape = 's32[1]{0}', space=sflag, size = 0x4, scoped, tag = 'scoped memory for tpu_custom_call.1']
    #allocation7 [shape = 'u8[65536]{0}', space=vmem, size = 0x10000, scoped, tag = 'output window, operand 0']
    %8 = vsyncpa [#allocation3], 0
    %s9 = scalar_lea.sflag [#allocation3], 1
    %10 = vsyncpa %s9, 0
    %11 = vsyncpa [#allocation6], 0
    %12 = vsyncpa [#allocation4], 0
    %s13 = scalar_lea.sflag [#allocation4], 1
    %14 = vsyncpa %s13, 0
    loop: start=0, step=1, limit=4
    $region2: #{tpu_custom_call.1} parent=1 // loop_pre_header
      _
    $region3: #{tpu_custom_call.1} parent=1 // loop_header
      %s16 = sphi 0, %s20
      %p17 = scmp.ge.s32.totalorder %s16, 4
      %s23 = sphi 0, %s35
      %s24 = sphi 0, %s31
      %s25 = sphi 0, %s23
      %s26 = sphi 0, %s24
      %s27 = sphi 0, %s25
      %s28 = sphi 0, %s26
      %s40 = sphi 0, %s42
      %s43 = sphi 0, %s40
      %s44 = sphi 0, %s43
      %s60 = sphi 0, %s44
      %s64 = sphi 0, %s64
      %s66 = sphi 0, %s64
      %s67 = sphi 0, %s66
      %s81 = sphi 0, %s67
      %s85 = sphi 0, %s85
      %s87 = sphi 0, %s85
      %s88 = sphi 0, %s87
      %s102 = sphi 0, %s88
      %s110 = sphi 0, %s112
      %s113 = sphi 0, %s110
      %s114 = sphi 0, %s113
      %s130 = sphi 0, %s114
    $region4: #{tpu_custom_call.1} parent=1 // loop_header_branch
      %19 = sbr.rel (%p17) target = $region8
    $region5: #{tpu_custom_call.1} parent=1 // loop_body
      %s21 = ssub.s32 %s16, 1
      %s22 = ssub.s32 %s16, 2
      %s29 = sadd.s32 1, %s24
      %p30 = scmp.ge.s32.totalorder %s29, 1
      %s31 = scalar_select %p30, 0, %s29
      %s32 = sadd.s32 1, %s23
      %s33 = scalar_select %p30, %s32, %s23
      %p34 = scmp.ge.s32.totalorder %s33, 2
      %s35 = scalar_select %p34, 0, %s33
      %s36 = ssub.s32 %s23, %s35
      %s37 = ssub.s32 %s24, %s31
      %s38 = sor.u32 %s36, %s37
      %p39 = scmp.eq.s32.totalorder %s38, 0
      %s41 = sadd.s32 %s40, 1
      %s42 = scalar_select %p39, %s40, %s41
      %p45 = pneg %p39
      %p46 = scmp.eq.s32.totalorder %s16, 1
      %p47 = por %p45, %p46
      %p48 = scmp.ne.s32.totalorder %s40, %s43
      %p49 = scmp.eq.s32.totalorder %s16, 0
      %p50 = por %p48, %p49
      %p51 = scmp.ne.s32.totalorder %s40, %s43
      %p52 = scmp.eq.s32.totalorder %s21, 1
      %p53 = por %p51, %p52
      %p54 = scmp.ne.s32.totalorder %s43, %s44
      %p55 = scmp.eq.s32.totalorder %s21, 0
      %p56 = por %p54, %p55
      %p57 = scmp.ne.s32.totalorder %s43, %s44
      %p58 = scmp.eq.s32.totalorder %s22, 1
      %p59 = por %p57, %p58
      %p61 = scmp.ne.s32.totalorder %s44, %s60
      %p62 = scmp.eq.s32.totalorder %s22, 0
      %p63 = por %p61, %p62
      %s65 = sadd.s32 %s64, 1
      %p68 = scmp.eq.s32.totalorder %s16, 1
      %p69 = scmp.ne.s32.totalorder %s64, %s66
      %p70 = scmp.eq.s32.totalorder %s16, 0
      %p71 = por %p69, %p70
      %p72 = scmp.ne.s32.totalorder %s64, %s66
      %p73 = scmp.eq.s32.totalorder %s21, 1
      %p74 = por %p72, %p73
      %p75 = scmp.ne.s32.totalorder %s66, %s67
      %p76 = scmp.eq.s32.totalorder %s21, 0
      %p77 = por %p75, %p76
      %p78 = scmp.ne.s32.totalorder %s66, %s67
      %p79 = scmp.eq.s32.totalorder %s22, 1
      %p80 = por %p78, %p79
      %p82 = scmp.ne.s32.totalorder %s67, %s81
      %p83 = scmp.eq.s32.totalorder %s22, 0
      %p84 = por %p82, %p83
      %s86 = sadd.s32 %s85, 1
      %p89 = scmp.eq.s32.totalorder %s16, 1
      %p90 = scmp.ne.s32.totalorder %s85, %s87
      %p91 = scmp.eq.s32.totalorder %s16, 0
      %p92 = por %p90, %p91
      %p93 = scmp.ne.s32.totalorder %s85, %s87
      %p94 = scmp.eq.s32.totalorder %s21, 1
      %p95 = por %p93, %p94
      %p96 = scmp.ne.s32.totalorder %s87, %s88
      %p97 = scmp.eq.s32.totalorder %s21, 0
      %p98 = por %p96, %p97
      %p99 = scmp.ne.s32.totalorder %s87, %s88
      %p100 = scmp.eq.s32.totalorder %s22, 1
      %p101 = por %p99, %p100
      %p103 = scmp.ne.s32.totalorder %s88, %s102
      %p104 = scmp.eq.s32.totalorder %s22, 0
      %p105 = por %p103, %p104
      %s106 = ssub.s32 %s23, %s35
      %s107 = ssub.s32 %s24, %s31
      %s108 = sor.u32 %s106, %s107
      %p109 = scmp.eq.s32.totalorder %s108, 0
      %s111 = sadd.s32 %s110, 1
      %s112 = scalar_select %p109, %s110, %s111
      %p115 = pneg %p109
      %p116 = scmp.eq.s32.totalorder %s16, 1
      %p117 = por %p115, %p116
      %p118 = scmp.ne.s32.totalorder %s110, %s113
      %p119 = scmp.eq.s32.totalorder %s16, 0
      %p120 = por %p118, %p119
      %p121 = scmp.ne.s32.totalorder %s110, %s113
      %p122 = scmp.eq.s32.totalorder %s21, 1
      %p123 = por %p121, %p122
      %p124 = scmp.ne.s32.totalorder %s113, %s114
      %p125 = scmp.eq.s32.totalorder %s21, 0
      %p126 = por %p124, %p125
      %p127 = scmp.ne.s32.totalorder %s113, %s114
      %p128 = scmp.eq.s32.totalorder %s22, 1
      %p129 = por %p127, %p128
      %p131 = scmp.ne.s32.totalorder %s114, %s130
      %p132 = scmp.eq.s32.totalorder %s22, 0
      %p133 = por %p131, %p132
      %p134 = scmp.le.s32.totalorder 1, %s16
      %p135 = scmp.lt.s32.totalorder %s16, 3
      %p136 = pnand %p134, %p135
      %p137 = pneg %p136
      // Predicated region
      $region9: #{tpu_custom_call.1} parent=5 // pred_check
        _
      $region10: #{tpu_custom_call.1} parent=5 // pred_check_branch
        %139 = sbr.rel (%p136) target = $region12
      $region11: #{tpu_custom_call.1} parent=5 // pred_region
        %s140 = ssub.s32 %s16, 1
        // Predicated region
        $region13: #{tpu_custom_call.1} parent=11 // pred_check
          %p141 = pneg %p77
        $region14: #{tpu_custom_call.1} parent=11 // pred_check_branch
          %143 = sbr.rel (%p141) target = $region16
        $region15: #{tpu_custom_call.1} parent=11 // pred_region
          %s145 = ssub.s32 2048, 2048
          %146 = vsyncadd [#allocation6], %s145
          %s147 = sshll.u32 [#allocation5], 4
          %s148 = int_to_ptr.vmem [resolvable:$true] %s147
          %153 = dma.hbm_to_vmem [thread:$0]  %s1, 2048, %s148, [#allocation6], 128, 128, 8
        $region16: #{tpu_custom_call.1} parent=11 // pred_fallthru
          _
        // Predicated region
        $region17: #{tpu_custom_call.1} parent=11 // pred_check
          %p154 = pneg %p98
        $region18: #{tpu_custom_call.1} parent=11 // pred_check_branch
          %156 = sbr.rel (%p154) target = $region20
        $region19: #{tpu_custom_call.1} parent=11 // pred_region
          _
        $region20: #{tpu_custom_call.1} parent=11 // pred_fallthru
          _
      $region12: #{tpu_custom_call.1} parent=5 // pred_fallthru
        _
      %p157 = scmp.lt.s32.totalorder %s16, 2
      // Predicated region
      $region21: #{tpu_custom_call.1} parent=5 // pred_check
        %p158 = pneg %p157
      $region22: #{tpu_custom_call.1} parent=5 // pred_check_branch
        %160 = sbr.rel (%p158) target = $region24
      $region23: #{tpu_custom_call.1} parent=5 // pred_region
        // Predicated region
        $region25: #{tpu_custom_call.1} parent=23 // pred_check
          %p161 = pneg %p50
        $region26: #{tpu_custom_call.1} parent=23 // pred_check_branch
          %163 = sbr.rel (%p161) target = $region28
        $region27: #{tpu_custom_call.1} parent=23 // pred_region
          %s164 = sand.u32 %s40, 1
          %s165 = scalar_lea.sflag [#allocation3], %s164
          %s166 = sand.u32 %s40, 1
          %s167 = smul.addr %s166, 64
          %s168 = scalar_lea.vmem [#allocation2], %s167
          %s169 = smul.u32 8, %s24
          %s171 = ssub.s32 1024, 1024
          %172 = vsyncadd %s165, %s171
          %s173 = smul.addr %s23, 8
          %s174 = sadd.s32 %s169, %s173
          %s175 = smul.addr %s174, 128
          %s176 = scalar_lea.hbm %s0, %s175
          %s177 = sshll.u32 %s168, 4
          %s178 = int_to_ptr.vmem [resolvable:$true] %s177
          %183 = dma.hbm_to_vmem [thread:$0]  %s176, 1024, %s178, %s165, 128, 128, 8
        $region28: #{tpu_custom_call.1} parent=23 // pred_fallthru
          _
      $region24: #{tpu_custom_call.1} parent=5 // pred_fallthru
        _
      %p184 = scmp.le.s32.totalorder 1, %s16
      %p185 = scmp.lt.s32.totalorder %s16, 3
      %p186 = pnand %p184, %p185
      %p187 = pneg %p186
      // Predicated region
      $region29: #{tpu_custom_call.1} parent=5 // pred_check
        _
      $region30: #{tpu_custom_call.1} parent=5 // pred_check_branch
        %189 = sbr.rel (%p186) target = $region32
      $region31: #{tpu_custom_call.1} parent=5 // pred_region
        %s190 = ssub.s32 %s16, 1
        %s191 = sand.u32 %s43, 1
        %s192 = scalar_lea.sflag [#allocation3], %s191
        %s193 = sand.u32 %s43, 1
        %s194 = smul.addr %s193, 64
        %s195 = scalar_lea.vmem [#allocation2], %s194
        // Predicated region
        $region33: #{tpu_custom_call.1} parent=31 // pred_check
          %p196 = pneg %p56
        $region34: #{tpu_custom_call.1} parent=31 // pred_check_branch
          %198 = sbr.rel (%p196) target = $region36
        $region35: #{tpu_custom_call.1} parent=31 // pred_region
          %199 = dma.done %s192, 1024
        $region36: #{tpu_custom_call.1} parent=31 // pred_fallthru
          _
        // Predicated region
        $region37: #{tpu_custom_call.1} parent=31 // pred_check
          %p200 = pneg %p77
        $region38: #{tpu_custom_call.1} parent=31 // pred_check_branch
          %202 = sbr.rel (%p200) target = $region40
        $region39: #{tpu_custom_call.1} parent=31 // pred_region
          %203 = dma.done [#allocation6], 2048
        $region40: #{tpu_custom_call.1} parent=31 // pred_fallthru
          _
        %s204 = sand.u32 %s43, 1
        %s205 = scalar_lea.sflag [#allocation3], %s204
        %s206 = sand.u32 %s43, 1
        %s207 = smul.addr %s206, 64
        %s208 = scalar_lea.vmem [#allocation2], %s207
        %p209 = pneg %p56
        %p210 = pneg %p53
        %p211 = pneg %p77
        %p212 = pneg %p74
        %p213 = pneg %p98
        %p214 = pneg %p95
        %p215 = pneg %p126
        %p216 = pneg %p123
        %s217 = sand.u32 %s113, 1
        %s218 = scalar_lea.sflag [#allocation4], %s217
        %s219 = sand.u32 %s113, 1
        %s220 = smul.addr %s219, 64
        %s221 = scalar_lea.vmem [#allocation7], %s220
        %s222 = smul.u32 8, %s26
        %s223 = smul.u32 8, %s26
        %v224 = vld [vmem:[%s195] sm:$0xff]
        %v225 = vld [vmem:[%s195 + $0x8] sm:$0xff]
        %v226 = vld [vmem:[%s195 + $0x10] sm:$0xff]
        %v227 = vld [vmem:[%s195 + $0x18] sm:$0xff]
        %v228 = vld [vmem:[%s195 + $0x20] sm:$0xff]
        %v229 = vld [vmem:[%s195 + $0x28] sm:$0xff]
        %v230 = vld [vmem:[%s195 + $0x30] sm:$0xff]
        %v231 = vld [vmem:[%s195 + $0x38] sm:$0xff]
        %v232 = vld [vmem:[#allocation5] sm:$0xff]
        %v233 = vld [vmem:[#allocation5 + $0x8] sm:$0xff]
        %v234 = vld [vmem:[#allocation5 + $0x10] sm:$0xff]
        %v235 = vld [vmem:[#allocation5 + $0x18] sm:$0xff]
        %v236 = vld [vmem:[#allocation5 + $0x20] sm:$0xff]
        %v237 = vld [vmem:[#allocation5 + $0x28] sm:$0xff]
        %v238 = vld [vmem:[#allocation5 + $0x30] sm:$0xff]
        %v239 = vld [vmem:[#allocation5 + $0x38] sm:$0xff]
        %v240 = vld [vmem:[#allocation5 + $0x40] sm:$0xff]
        %v241 = vld [vmem:[#allocation5 + $0x48] sm:$0xff]
        %v242 = vld [vmem:[#allocation5 + $0x50] sm:$0xff]
        %v243 = vld [vmem:[#allocation5 + $0x58] sm:$0xff]
        %v244 = vld [vmem:[#allocation5 + $0x60] sm:$0xff]
        %v245 = vld [vmem:[#allocation5 + $0x68] sm:$0xff]
        %v246 = vld [vmem:[#allocation5 + $0x70] sm:$0xff]
        %v247 = vld [vmem:[#allocation5 + $0x78] sm:$0xff]
        %v248 = vld [vmem:[%s2] sm:$0x1]
        %v250 = vlaneseq
        %v251 = vshrl.u32 %v250, 7
        %v252 = vsub.s32 0, %v251
        %v253 = vrot.slane %v248, %v252
        %255 = vmatprep.subr.mxu0 0.0
        %256 = vmatpush1.msra.mxu0 %v247
        %257 = vmatprep.subr.mxu0 0.0
        %258 = vmatpush1.msra.mxu0 %v246
        %259 = vmatprep.subr.mxu0 0.0
        %260 = vmatpush1.msra.mxu0 %v245
        %261 = vmatprep.subr.mxu0 0.0
        %262 = vmatpush1.msra.mxu0 %v244
        %263 = vmatprep.subr.mxu0 0.0
        %264 = vmatpush1.msra.mxu0 %v243
        %265 = vmatprep.subr.mxu0 0.0
        %266 = vmatpush1.msra.mxu0 %v242
        %267 = vmatprep.subr.mxu0 0.0
        %268 = vmatpush1.msra.mxu0 %v241
        %269 = vmatprep.subr.mxu0 0.0
        %270 = vmatpush1.msra.mxu0 %v240
        %271 = vmatprep.subr.mxu0 0.0
        %272 = vmatpush1.msra.mxu0 %v239
        %273 = vmatprep.subr.mxu0 0.0
        %274 = vmatpush1.msra.mxu0 %v238
        %275 = vmatprep.subr.mxu0 0.0
        %276 = vmatpush1.msra.mxu0 %v237
        %277 = vmatprep.subr.mxu0 0.0
        %278 = vmatpush1.msra.mxu0 %v236
        %279 = vmatprep.subr.mxu0 0.0
        %280 = vmatpush1.msra.mxu0 %v235
        %281 = vmatprep.subr.mxu0 0.0
        %282 = vmatpush1.msra.mxu0 %v234
        %283 = vmatprep.subr.mxu0 0.0
        %284 = vmatpush1.msra.mxu0 %v233
        %285 = vmatprep.subr.mxu0 0.0
        %286 = vmatpush1.msra.mxu0 %v232
        %287 = vmatprep.subr.mxu0 0.0
        %288 = vmatpush2.msra.mxu0 0.0
        %289 = vmatprep.subr.mxu0 0.0
        %290 = vmatpush2.msra.mxu0 0.0
        %291 = vmatprep.subr.mxu0 0.0
        %292 = vmatpush2.msra.mxu0 0.0
        %293 = vmatprep.subr.mxu0 0.0
        %294 = vmatpush2.msra.mxu0 0.0
        %295 = vmatprep.subr.mxu0 0.0
        %296 = vmatpush2.msra.mxu0 0.0
        %297 = vmatprep.subr.mxu0 0.0
        %298 = vmatpush2.msra.mxu0 0.0
        %299 = vmatprep.subr.mxu0 0.0
        %300 = vmatpush2.msra.mxu0 0.0
        %301 = vmatprep.subr.mxu0 0.0
        %302 = vmatpush2.msra.mxu0 0.0
        %303 = vmatprep.subr.mxu0 0.0
        %304 = vmatpush2.msra.mxu0 0.0
        %305 = vmatprep.subr.mxu0 0.0
        %306 = vmatpush2.msra.mxu0 0.0
        %307 = vmatprep.subr.mxu0 0.0
        %308 = vmatpush2.msra.mxu0 0.0
        %309 = vmatprep.subr.mxu0 0.0
        %310 = vmatpush2.msra.mxu0 0.0
        %311 = vmatprep.subr.mxu0 0.0
        %312 = vmatpush2.msra.mxu0 0.0
        %313 = vmatprep.subr.mxu0 0.0
        %314 = vmatpush2.msra.mxu0 0.0
        %315 = vmatprep.subr.mxu0 0.0
        %316 = vmatpush2.msra.mxu0 0.0
        %317 = vmatprep.subr.mxu0 0.0
        %318 = vmatpush2.msra.mxu0 0.0
        %319 = vmatprep.mubr.f32.mxu0 0.0
        %320 = vmatmul.mubr.f32.gmra.mxu0 %v224
        %v321 = vpop.f32.mrf.mxu0
        %v322 = vadd.f32 %v253, %v321
        %v323 = vpop.f32.mrf.mxu0
        %324 = vmatprep.mubr.f32.mxu0 0.0
        %325 = vmatmul.mubr.f32.gmra.mxu0 %v225
        %v326 = vpop.f32.mrf.mxu0
        %v327 = vadd.f32 %v253, %v326
        %v328 = vpop.f32.mrf.mxu0
        %329 = vmatprep.mubr.f32.mxu0 0.0
        %330 = vmatmul.mubr.f32.gmra.mxu0 %v226
        %v331 = vpop.f32.mrf.mxu0
        %v332 = vadd.f32 %v253, %v331
        %v333 = vpop.f32.mrf.mxu0
        %334 = vmatprep.mubr.f32.mxu0 0.0
        %335 = vmatmul.mubr.f32.gmra.mxu0 %v227
        %v336 = vpop.f32.mrf.mxu0
        %v337 = vadd.f32 %v253, %v336
        %v338 = vpop.f32.mrf.mxu0
        %339 = vmatprep.mubr.f32.mxu0 0.0
        %340 = vmatmul.mubr.f32.gmra.mxu0 %v228
        %v341 = vpop.f32.mrf.mxu0
        %v342 = vadd.f32 %v253, %v341
        %v343 = vpop.f32.mrf.mxu0
        %344 = vmatprep.mubr.f32.mxu0 0.0
        %345 = vmatmul.mubr.f32.gmra.mxu0 %v229
        %v346 = vpop.f32.mrf.mxu0
        %v347 = vadd.f32 %v253, %v346
        %v348 = vpop.f32.mrf.mxu0
        %349 = vmatprep.mubr.f32.mxu0 0.0
        %350 = vmatmul.mubr.f32.gmra.mxu0 %v230
        %v351 = vpop.f32.mrf.mxu0
        %v352 = vadd.f32 %v253, %v351
        %v353 = vpop.f32.mrf.mxu0
        %354 = vmatprep.mubr.f32.mxu0 0.0
        %355 = vmatmul.mubr.f32.gmra.mxu0 %v231
        %v356 = vpop.f32.mrf.mxu0
        %v357 = vadd.f32 %v253, %v356
        %v358 = vpop.f32.mrf.mxu0
        %359 = vdwg.mxu0
        %360 = vst [vmem:[%s221] sm:$0xff] %v322
        %361 = vst [vmem:[%s221 + $0x8] sm:$0xff] %v327
        %362 = vst [vmem:[%s221 + $0x10] sm:$0xff] %v332
        %363 = vst [vmem:[%s221 + $0x18] sm:$0xff] %v337
        %364 = vst [vmem:[%s221 + $0x20] sm:$0xff] %v342
        %365 = vst [vmem:[%s221 + $0x28] sm:$0xff] %v347
        %366 = vst [vmem:[%s221 + $0x30] sm:$0xff] %v352
        %367 = vst [vmem:[%s221 + $0x38] sm:$0xff] %v357
        %s368 = sand.u32 %s113, 1
        %s369 = scalar_lea.sflag [#allocation4], %s368
        %s370 = sand.u32 %s113, 1
        %s371 = smul.addr %s370, 64
        %s372 = scalar_lea.vmem [#allocation7], %s371
        // Predicated region
        $region41: #{tpu_custom_call.1} parent=31 // pred_check
          %p373 = pneg %p123
        $region42: #{tpu_custom_call.1} parent=31 // pred_check_branch
          %375 = sbr.rel (%p373) target = $region44
        $region43: #{tpu_custom_call.1} parent=31 // pred_region
          %s376 = smul.u32 8, %s26
          %s378 = ssub.s32 1024, 1024
          %379 = vsyncadd %s369, %s378
          %s380 = smul.addr %s25, 8
          %s381 = sadd.s32 %s376, %s380
          %s382 = smul.addr %s381, 128
          %s383 = scalar_lea.hbm %s3, %s382
          %s384 = sshll.u32 %s372, 4
          %s385 = int_to_ptr.vmem [resolvable:$true] %s384
          %390 = dma.vmem_to_hbm [thread:$0]  %s385, 1024, %s383, %s369, 128, 128, 8
        $region44: #{tpu_custom_call.1} parent=31 // pred_fallthru
          _
      $region32: #{tpu_custom_call.1} parent=5 // pred_fallthru
        _
      %p391 = scmp.le.s32.totalorder 2, %s16
      // Predicated region
      $region45: #{tpu_custom_call.1} parent=5 // pred_check
        %p392 = pneg %p391
      $region46: #{tpu_custom_call.1} parent=5 // pred_check_branch
        %394 = sbr.rel (%p392) target = $region48
      $region47: #{tpu_custom_call.1} parent=5 // pred_region
        %s395 = ssub.s32 %s16, 2
        // Predicated region
        $region49: #{tpu_custom_call.1} parent=47 // pred_check
          %p396 = pneg %p129
        $region50: #{tpu_custom_call.1} parent=47 // pred_check_branch
          %398 = sbr.rel (%p396) target = $region52
        $region51: #{tpu_custom_call.1} parent=47 // pred_region
          %s399 = sand.u32 %s114, 1
          %s400 = scalar_lea.sflag [#allocation4], %s399
          %s401 = sand.u32 %s114, 1
          %s402 = smul.addr %s401, 64
          %s403 = scalar_lea.vmem [#allocation7], %s402
          %404 = dma.done %s400, 1024
        $region52: #{tpu_custom_call.1} parent=47 // pred_fallthru
          _
      $region48: #{tpu_custom_call.1} parent=5 // pred_fallthru
        _
    $region6: #{tpu_custom_call.1} parent=1 // loop_footer
      %s20 = sadd.s32 1, %s16
    $region7: #{tpu_custom_call.1} parent=1 // loop_footer_branch
      %15 = sbr.rel target = $region3
    $region8: #{tpu_custom_call.1} parent=1 // loop_exit
      _
    %405 = vsyncpa [#allocation3], 1
    %s406 = scalar_lea.sflag [#allocation3], 1
    %407 = vsyncpa %s406, 1
    %408 = vsyncpa [#allocation6], 1
    %409 = vsyncpa [#allocation4], 1
    %s410 = scalar_lea.sflag [#allocation4], 1
    %411 = vsyncpa %s410, 1

</llo_original>
